<compile_context>
chip_gen: v5e
topology: v5e:2x2
jax: 0.10.0
libtpu: 0.0.40
codegen_flags: <defaults>
</compile_context>

<pallas_src>
import functools

import jax
import jax.numpy as jnp
from jax.experimental import pallas as pl
from jax.experimental.pallas import tpu as pltpu

_LANE = 128            # vreg lane width
_SUB = 8               # f32 sublane granularity
_MAX_TILE_ROWS = 2048  # 2048*128*4B = 1 MiB/stream tile; 10 streams x 2 bufs ~ 20 MiB
_MIN_GRID_STEPS = 4    # keep the parallel axis populated (megacore on v7x)
_VMEM_LIMIT = 48 << 20  # above 16/32 MiB scoped defaults, under v7x's 64 MiB physical


def _if_neuron_kernel(vth, v_reset, reset_by_subtraction,
                      dv_ref, v_ref, acc_ref, out_ref, cnt_ref,
                      spike_o, v_o, acc_o, out_o, cnt_o):
    dv = dv_ref[...]
    v = v_ref[...] + dv
    spike = (v >= vth).astype(jnp.float32)

    acc_o[...] = acc_ref[...] + dv
    out_o[...] = out_ref[...] + spike
    # NOTE: output and spikecount share the same update; kept as separate
    # streams because callers may reset/initialize them independently.
    cnt_o[...] = cnt_ref[...] + spike
    spike_o[...] = vth * spike

    if reset_by_subtraction:
        v_o[...] = v - spike * vth
    else:
        v_o[...] = jnp.where(spike > 0, jnp.float32(v_reset), v)


def _jnp_step(dv, v, acc, out, cnt, vth, v_reset, reset_by_subtraction):
    """Plain-jnp path for the ragged (< one tile) tail."""
    v = v + dv
    spike = (v >= vth).astype(jnp.float32)
    acc = acc + dv
    out = out + spike
    cnt = cnt + spike
    if reset_by_subtraction:
        v = v - spike * vth
    else:
        v = jnp.where(spike > 0, jnp.float32(v_reset), v)
    return [vth * spike, v, acc, out, cnt]


def if_neuron_step(dv, v, acc_input, output, spikecount, *,
                   v_threshold=1.0, v_reset=0.0,
                   reset_method='reset_by_subtraction'):
    """One eval-mode forward of IF_Neuron.

    Returns (spike_total, v_new, acc_input_new, output_new, spikecount_new),
    each with the same shape as `dv`, in float32.
    """
    orig_shape = dv.shape
    n = int(dv.size)
    vth = float(v_threshold)
    vr = float(v_reset)
    rbs = (reset_method == 'reset_by_subtraction')

    # Flatten (free for contiguous arrays) -- no padding copies.
    flats = [jnp.asarray(x, jnp.float32).reshape(-1)
             for x in (dv, v, acc_input, output, spikecount)]

    # Choose a tile size: as big as possible up to _MAX_TILE_ROWS, but keep a
    # few grid steps so both TensorCores on v7x get work.
    rows_total = (n // _LANE // _SUB) * _SUB
    tile_rows = min(_MAX_TILE_ROWS, rows_total)
    if tile_rows > _SUB and rows_total // tile_rows < _MIN_GRID_STEPS:
        tile_rows = max(_SUB, ((rows_total // _MIN_GRID_STEPS) // _SUB) * _SUB)

    main_rows = 0
    grid_steps = 0
    if tile_rows > 0:
        grid_steps = rows_total // tile_rows
        main_rows = grid_steps * tile_rows
    main = main_rows * _LANE

    main_outs = None
    if main > 0:
        kernel = functools.partial(_if_neuron_kernel, vth, vr, rbs)
        tile_spec = pl.BlockSpec((tile_rows, _LANE), lambda i: (i, 0))
        slabs = [f[:main].reshape(main_rows, _LANE) for f in flats]
        out_sds = jax.ShapeDtypeStruct((main_rows, _LANE), jnp.float32)

        main_outs = pl.pallas_call(
            kernel,
            out_shape=(out_sds,) * 5,
            grid=(grid_steps,),
            in_specs=[tile_spec] * 5,
            out_specs=(tile_spec,) * 5,
            # inputs: dv=0, v=1, acc=2, output=3, spikecount=4
            # outputs: spike=0, v=1, acc=2, output=3, spikecount=4
            input_output_aliases={1: 1, 2: 2, 3: 3, 4: 4},
            compiler_params=pltpu.CompilerParams(
                dimension_semantics=("parallel",),
                vmem_limit_bytes=_VMEM_LIMIT),
        )(*slabs)
        main_outs = [o.reshape(-1) for o in main_outs]

    tail_outs = None
    if main < n:
        tail_outs = _jnp_step(*[f[main:] for f in flats], vth, vr, rbs)

    if main_outs is None:
        results = tail_outs
    elif tail_outs is None:
        results = main_outs
    else:
        results = [jnp.concatenate([a, b]) for a, b in zip(main_outs, tail_outs)]

    return tuple(r.reshape(orig_shape) for r in results)


# TODO(synk): the 'train' branch (straight-through surrogate gradient via
# out - out.detach() + output) is a gradient-only trick; its forward value is
# just the accumulated `output` buffer, so it is not implemented as a kernel.


def _reference_step(dv, v, acc_input, output, spikecount,
                    v_threshold=1.0, v_reset=0.0,
                    reset_method='reset_by_subtraction'):
    v = v + dv
    spike = (v >= v_threshold).astype(jnp.float32)
    acc_input = acc_input + dv
    output = output + spike
    if reset_method == 'reset_by_subtraction':
        v = v - spike * v_threshold
    else:
        v = jnp.where(spike > 0, v_reset, v)
    spikecount = spikecount + spike
    return v_threshold * spike, v, acc_input, output, spikecount


if __name__ == "__main__":
    key = jax.random.PRNGKey(0)
    B, C, H, W = 2, 4, 16, 16   # NCHW, matching the PyTorch convention

    def zeros():
        return jnp.zeros((B, C, H, W), jnp.float32)

    # Kernel state is donated (aliased in-place) each step, so the reference
    # path keeps its own separate buffers.
    state = (zeros(), zeros(), zeros(), zeros())          # v, acc, output, spikecount
    ref_state = (zeros(), zeros(), zeros(), zeros())

    step = jax.jit(if_neuron_step, donate_argnums=(1, 2, 3, 4))

    timesteps = 3
    for t in range(timesteps):
        key, sub = jax.random.split(key)
        dv = jax.random.normal(sub, (B, C, H, W), dtype=jnp.float32)

        spike_total, *new_state = step(dv, *state)
        ref_spike, *new_ref_state = _reference_step(dv, *ref_state)

        spike_total = jax.block_until_ready(spike_total)
        assert jnp.allclose(spike_total, ref_spike), "spike_total mismatch"
        for a, b in zip(new_state, new_ref_state):
            assert jnp.allclose(a, b, atol=1e-6), "state mismatch"

        state = tuple(new_state)
        ref_state = tuple(new_ref_state)

    print("KERNEL_OK")
</pallas_src>

<mosaic_0001>
module attributes {stable_mosaic.version = 11 : i64} {
  func.func @_if_neuron_kernel(%arg0: i32, %arg1: memref<8x128xf32, #tpu.memory_space<vmem>>, %arg2: memref<8x128xf32, #tpu.memory_space<vmem>>, %arg3: memref<8x128xf32, #tpu.memory_space<vmem>>, %arg4: memref<8x128xf32, #tpu.memory_space<vmem>>, %arg5: memref<8x128xf32, #tpu.memory_space<vmem>>, %arg6: memref<8x128xf32, #tpu.memory_space<vmem>>, %arg7: memref<8x128xf32, #tpu.memory_space<vmem>>, %arg8: memref<8x128xf32, #tpu.memory_space<vmem>>, %arg9: memref<8x128xf32, #tpu.memory_space<vmem>>, %arg10: memref<8x128xf32, #tpu.memory_space<vmem>>) attributes {dimension_semantics = [#tpu.dimension_semantics<parallel>], iteration_bounds = array<i64: 2>, scalar_prefetch = 0 : i64, scratch_operands = 0 : i64, tpu.core_type = #tpu.core_type<tc>, window_params = [{transform_indices = @transform_0, window_bounds = array<i64: 8, 128>}, {transform_indices = @transform_1, window_bounds = array<i64: 8, 128>}, {transform_indices = @transform_2, window_bounds = array<i64: 8, 128>}, {transform_indices = @transform_3, window_bounds = array<i64: 8, 128>}, {transform_indices = @transform_4, window_bounds = array<i64: 8, 128>}, {transform_indices = @transform_5, window_bounds = array<i64: 8, 128>}, {transform_indices = @transform_6, window_bounds = array<i64: 8, 128>}, {transform_indices = @transform_7, window_bounds = array<i64: 8, 128>}, {transform_indices = @transform_8, window_bounds = array<i64: 8, 128>}, {transform_indices = @transform_9, window_bounds = array<i64: 8, 128>}]} {
    %c0 = arith.constant 0 : index
    %c0_0 = arith.constant 0 : index
    %0 = vector.load %arg1[%c0, %c0_0] : memref<8x128xf32, #tpu.memory_space<vmem>>, vector<8x128xf32>
    %c0_1 = arith.constant 0 : index
    %c0_2 = arith.constant 0 : index
    %1 = vector.load %arg2[%c0_1, %c0_2] : memref<8x128xf32, #tpu.memory_space<vmem>>, vector<8x128xf32>
    %2 = arith.addf %1, %0 : vector<8x128xf32>
    %cst = arith.constant 1.000000e+00 : f32
    %3 = vector.broadcast %cst : f32 to vector<8x128xf32>
    %4 = arith.cmpf oge, %2, %3 : vector<8x128xf32>
    %5 = arith.extui %4 : vector<8x128xi1> to vector<8x128xi32>
    %6 = arith.sitofp %5 : vector<8x128xi32> to vector<8x128xf32>
    %c0_3 = arith.constant 0 : index
    %c0_4 = arith.constant 0 : index
    %7 = vector.load %arg3[%c0_3, %c0_4] : memref<8x128xf32, #tpu.memory_space<vmem>>, vector<8x128xf32>
    %8 = arith.addf %7, %0 : vector<8x128xf32>
    %c0_5 = arith.constant 0 : index
    %c0_6 = arith.constant 0 : index
    %9 = vector.load %arg8[%c0_5, %c0_6] : memref<8x128xf32, #tpu.memory_space<vmem>>, vector<8x128xf32>
    tpu.vector_store %arg8[%c0_5, %c0_6], %8 {strides = array<i32>} : memref<8x128xf32, #tpu.memory_space<vmem>>, vector<8x128xf32>,
    %c0_7 = arith.constant 0 : index
    %c0_8 = arith.constant 0 : index
    %10 = vector.load %arg4[%c0_7, %c0_8] : memref<8x128xf32, #tpu.memory_space<vmem>>, vector<8x128xf32>
    %11 = arith.addf %10, %6 : vector<8x128xf32>
    %c0_9 = arith.constant 0 : index
    %c0_10 = arith.constant 0 : index
    %12 = vector.load %arg9[%c0_9, %c0_10] : memref<8x128xf32, #tpu.memory_space<vmem>>, vector<8x128xf32>
    tpu.vector_store %arg9[%c0_9, %c0_10], %11 {strides = array<i32>} : memref<8x128xf32, #tpu.memory_space<vmem>>, vector<8x128xf32>,
    %c0_11 = arith.constant 0 : index
    %c0_12 = arith.constant 0 : index
    %13 = vector.load %arg5[%c0_11, %c0_12] : memref<8x128xf32, #tpu.memory_space<vmem>>, vector<8x128xf32>
    %14 = arith.addf %13, %6 : vector<8x128xf32>
    %c0_13 = arith.constant 0 : index
    %c0_14 = arith.constant 0 : index
    %15 = vector.load %arg10[%c0_13, %c0_14] : memref<8x128xf32, #tpu.memory_space<vmem>>, vector<8x128xf32>
    tpu.vector_store %arg10[%c0_13, %c0_14], %14 {strides = array<i32>} : memref<8x128xf32, #tpu.memory_space<vmem>>, vector<8x128xf32>,
    %cst_15 = arith.constant 1.000000e+00 : f32
    %16 = vector.broadcast %cst_15 : f32 to vector<8x128xf32>
    %17 = arith.mulf %16, %6 : vector<8x128xf32>
    %c0_16 = arith.constant 0 : index
    %c0_17 = arith.constant 0 : index
    %18 = vector.load %arg6[%c0_16, %c0_17] : memref<8x128xf32, #tpu.memory_space<vmem>>, vector<8x128xf32>
    tpu.vector_store %arg6[%c0_16, %c0_17], %17 {strides = array<i32>} : memref<8x128xf32, #tpu.memory_space<vmem>>, vector<8x128xf32>,
    %cst_18 = arith.constant 1.000000e+00 : f32
    %19 = vector.broadcast %cst_18 : f32 to vector<8x128xf32>
    %20 = arith.mulf %6, %19 : vector<8x128xf32>
    %21 = arith.subf %2, %20 : vector<8x128xf32>
    %c0_19 = arith.constant 0 : index
    %c0_20 = arith.constant 0 : index
    %22 = vector.load %arg7[%c0_19, %c0_20] : memref<8x128xf32, #tpu.memory_space<vmem>>, vector<8x128xf32>
    tpu.vector_store %arg7[%c0_19, %c0_20], %21 {strides = array<i32>} : memref<8x128xf32, #tpu.memory_space<vmem>>, vector<8x128xf32>,
    return
  }
  func.func @transform_0(%arg0: i32) -> (i32, i32) {
    %c0_i32 = arith.constant 0 : i32
    %c0_i32_0 = arith.constant 0 : i32
    return %arg0, %c0_i32 : i32, i32
  }
  func.func @transform_1(%arg0: i32) -> (i32, i32) {
    %c0_i32 = arith.constant 0 : i32
    %c0_i32_0 = arith.constant 0 : i32
    return %arg0, %c0_i32 : i32, i32
  }
  func.func @transform_2(%arg0: i32) -> (i32, i32) {
    %c0_i32 = arith.constant 0 : i32
    %c0_i32_0 = arith.constant 0 : i32
    return %arg0, %c0_i32 : i32, i32
  }
  func.func @transform_3(%arg0: i32) -> (i32, i32) {
    %c0_i32 = arith.constant 0 : i32
    %c0_i32_0 = arith.constant 0 : i32
    return %arg0, %c0_i32 : i32, i32
  }
  func.func @transform_4(%arg0: i32) -> (i32, i32) {
    %c0_i32 = arith.constant 0 : i32
    %c0_i32_0 = arith.constant 0 : i32
    return %arg0, %c0_i32 : i32, i32
  }
  func.func @transform_5(%arg0: i32) -> (i32, i32) {
    %c0_i32 = arith.constant 0 : i32
    %c0_i32_0 = arith.constant 0 : i32
    return %arg0, %c0_i32 : i32, i32
  }
  func.func @transform_6(%arg0: i32) -> (i32, i32) {
    %c0_i32 = arith.constant 0 : i32
    %c0_i32_0 = arith.constant 0 : i32
    return %arg0, %c0_i32 : i32, i32
  }
  func.func @transform_7(%arg0: i32) -> (i32, i32) {
    %c0_i32 = arith.constant 0 : i32
    %c0_i32_0 = arith.constant 0 : i32
    return %arg0, %c0_i32 : i32, i32
  }
  func.func @transform_8(%arg0: i32) -> (i32, i32) {
    %c0_i32 = arith.constant 0 : i32
    %c0_i32_0 = arith.constant 0 : i32
    return %arg0, %c0_i32 : i32, i32
  }
  func.func @transform_9(%arg0: i32) -> (i32, i32) {
    %c0_i32 = arith.constant 0 : i32
    %c0_i32_0 = arith.constant 0 : i32
    return %arg0, %c0_i32 : i32, i32
  }
}

</mosaic_0001>

<llo_original>
// kernel: if_neuron_step.1
$region0: #{if_neuron_step.1}
  #allocation0 [shape = 'u32[]', space=smem, size = 0x4, offset = 0x4, fixed_abs, tag = 'smem constant byte address 0x4 - core index']
  #allocation1 [shape = 'u32[72,128]{1,0:T(1,128)}', space=vmem, size = 0x9000, scoped, tag = 'internal scratch']
  %s0 = inlined_call_operand.vmem [shape: f32[16,128], index: 0, kind: input, shape index: {}]
  %s1 = inlined_call_operand.vmem [shape: f32[16,128], index: 1, kind: input, shape index: {}, may-alias: {1,6}]
  %s2 = inlined_call_operand.vmem [shape: f32[16,128], index: 2, kind: input, shape index: {}, may-alias: {2,7}]
  %s3 = inlined_call_operand.vmem [shape: f32[16,128], index: 3, kind: input, shape index: {}, may-alias: {3,8}]
  %s4 = inlined_call_operand.vmem [shape: f32[16,128], index: 4, kind: input, shape index: {}, may-alias: {4,9}]
  %s5 = inlined_call_operand.vmem [shape: f32[16,128], index: 5, kind: output, shape index: {0}]
  %s6 = inlined_call_operand.vmem [shape: f32[16,128], index: 6, kind: output, shape index: {1}, may-alias: {1,6}]
  %s7 = inlined_call_operand.vmem [shape: f32[16,128], index: 7, kind: output, shape index: {2}, may-alias: {2,7}]
  %s8 = inlined_call_operand.vmem [shape: f32[16,128], index: 8, kind: output, shape index: {3}, may-alias: {3,8}]
  %s9 = inlined_call_operand.vmem [shape: f32[16,128], index: 9, kind: output, shape index: {4}, may-alias: {4,9}]
  %10 = xla_tuple %s5, %s6, %s7, %s8, %s9
  %s11 = sld [smem:[#allocation0]]
  $region85: #{if_neuron_step.1} parent=0
    _
  %s13 = ssub.s32 1, %s11
  %s14 = scalar_select 0, %s13, %s11
  loop: start=0, step=1, limit=4
  $region2: #{if_neuron_step.1} parent=0 // loop_pre_header
    _
  $region3: #{if_neuron_step.1} parent=0 // loop_header
    %s16 = sphi 0, %s20
    %p17 = scmp.ge.s32.totalorder %s16, 4
    %s26 = sphi 0, %s28
    %s29 = sphi 0, %s26
    %s30 = sphi 0, %s29
    %s46 = sphi 0, %s30
    %s52 = sphi 0, %s54
    %s55 = sphi 0, %s52
    %s56 = sphi 0, %s55
    %s72 = sphi 0, %s56
    %s78 = sphi 0, %s80
    %s81 = sphi 0, %s78
    %s82 = sphi 0, %s81
    %s98 = sphi 0, %s82
    %s104 = sphi 0, %s106
    %s107 = sphi 0, %s104
    %s108 = sphi 0, %s107
    %s124 = sphi 0, %s108
    %s130 = sphi 0, %s132
    %s133 = sphi 0, %s130
    %s134 = sphi 0, %s133
    %s150 = sphi 0, %s134
    %s156 = sphi 0, %s158
    %s159 = sphi 0, %s156
    %s160 = sphi 0, %s159
    %s176 = sphi 0, %s160
    %s182 = sphi 0, %s184
    %s185 = sphi 0, %s182
    %s186 = sphi 0, %s185
    %s202 = sphi 0, %s186
    %s208 = sphi 0, %s210
    %s211 = sphi 0, %s208
    %s212 = sphi 0, %s211
    %s228 = sphi 0, %s212
    %s234 = sphi 0, %s236
    %s237 = sphi 0, %s234
    %s238 = sphi 0, %s237
    %s254 = sphi 0, %s238
    %s260 = sphi 0, %s262
    %s263 = sphi 0, %s260
    %s264 = sphi 0, %s263
    %s280 = sphi 0, %s264
  $region4: #{if_neuron_step.1} parent=0 // loop_header_branch
    %19 = sbr.rel (%p17) target = $region8
  $region5: #{if_neuron_step.1} parent=0 // loop_body
    %s21 = ssub.s32 %s16, 1
    %s22 = ssub.s32 %s16, 2
    %s23 = sadd.s32 %s16, 1
    %s24 = ssub.s32 %s16, %s23
    %p25 = scmp.eq.s32.totalorder %s24, 0
    %s27 = sadd.s32 %s26, 1
    %s28 = scalar_select %p25, %s26, %s27
    %p31 = pneg %p25
    %p32 = scmp.eq.s32.totalorder %s16, 1
    %p33 = por %p31, %p32
    %p34 = scmp.ne.s32.totalorder %s26, %s29
    %p35 = scmp.eq.s32.totalorder %s16, 0
    %p36 = por %p34, %p35
    %p37 = scmp.ne.s32.totalorder %s26, %s29
    %p38 = scmp.eq.s32.totalorder %s21, 1
    %p39 = por %p37, %p38
    %p40 = scmp.ne.s32.totalorder %s29, %s30
    %p41 = scmp.eq.s32.totalorder %s21, 0
    %p42 = por %p40, %p41
    %p43 = scmp.ne.s32.totalorder %s29, %s30
    %p44 = scmp.eq.s32.totalorder %s22, 1
    %p45 = por %p43, %p44
    %p47 = scmp.ne.s32.totalorder %s30, %s46
    %p48 = scmp.eq.s32.totalorder %s22, 0
    %p49 = por %p47, %p48
    %s50 = ssub.s32 %s16, %s23
    %p51 = scmp.eq.s32.totalorder %s50, 0
    %s53 = sadd.s32 %s52, 1
    %s54 = scalar_select %p51, %s52, %s53
    %p57 = pneg %p51
    %p58 = scmp.eq.s32.totalorder %s16, 1
    %p59 = por %p57, %p58
    %p60 = scmp.ne.s32.totalorder %s52, %s55
    %p61 = scmp.eq.s32.totalorder %s16, 0
    %p62 = por %p60, %p61
    %p63 = scmp.ne.s32.totalorder %s52, %s55
    %p64 = scmp.eq.s32.totalorder %s21, 1
    %p65 = por %p63, %p64
    %p66 = scmp.ne.s32.totalorder %s55, %s56
    %p67 = scmp.eq.s32.totalorder %s21, 0
    %p68 = por %p66, %p67
    %p69 = scmp.ne.s32.totalorder %s55, %s56
    %p70 = scmp.eq.s32.totalorder %s22, 1
    %p71 = por %p69, %p70
    %p73 = scmp.ne.s32.totalorder %s56, %s72
    %p74 = scmp.eq.s32.totalorder %s22, 0
    %p75 = por %p73, %p74
    %s76 = ssub.s32 %s16, %s23
    %p77 = scmp.eq.s32.totalorder %s76, 0
    %s79 = sadd.s32 %s78, 1
    %s80 = scalar_select %p77, %s78, %s79
    %p83 = pneg %p77
    %p84 = scmp.eq.s32.totalorder %s16, 1
    %p85 = por %p83, %p84
    %p86 = scmp.ne.s32.totalorder %s78, %s81
    %p87 = scmp.eq.s32.totalorder %s16, 0
    %p88 = por %p86, %p87
    %p89 = scmp.ne.s32.totalorder %s78, %s81
    %p90 = scmp.eq.s32.totalorder %s21, 1
    %p91 = por %p89, %p90
    %p92 = scmp.ne.s32.totalorder %s81, %s82
    %p93 = scmp.eq.s32.totalorder %s21, 0
    %p94 = por %p92, %p93
    %p95 = scmp.ne.s32.totalorder %s81, %s82
    %p96 = scmp.eq.s32.totalorder %s22, 1
    %p97 = por %p95, %p96
    %p99 = scmp.ne.s32.totalorder %s82, %s98
    %p100 = scmp.eq.s32.totalorder %s22, 0
    %p101 = por %p99, %p100
    %s102 = ssub.s32 %s16, %s23
    %p103 = scmp.eq.s32.totalorder %s102, 0
    %s105 = sadd.s32 %s104, 1
    %s106 = scalar_select %p103, %s104, %s105
    %p109 = pneg %p103
    %p110 = scmp.eq.s32.totalorder %s16, 1
    %p111 = por %p109, %p110
    %p112 = scmp.ne.s32.totalorder %s104, %s107
    %p113 = scmp.eq.s32.totalorder %s16, 0
    %p114 = por %p112, %p113
    %p115 = scmp.ne.s32.totalorder %s104, %s107
    %p116 = scmp.eq.s32.totalorder %s21, 1
    %p117 = por %p115, %p116
    %p118 = scmp.ne.s32.totalorder %s107, %s108
    %p119 = scmp.eq.s32.totalorder %s21, 0
    %p120 = por %p118, %p119
    %p121 = scmp.ne.s32.totalorder %s107, %s108
    %p122 = scmp.eq.s32.totalorder %s22, 1
    %p123 = por %p121, %p122
    %p125 = scmp.ne.s32.totalorder %s108, %s124
    %p126 = scmp.eq.s32.totalorder %s22, 0
    %p127 = por %p125, %p126
    %s128 = ssub.s32 %s16, %s23
    %p129 = scmp.eq.s32.totalorder %s128, 0
    %s131 = sadd.s32 %s130, 1
    %s132 = scalar_select %p129, %s130, %s131
    %p135 = pneg %p129
    %p136 = scmp.eq.s32.totalorder %s16, 1
    %p137 = por %p135, %p136
    %p138 = scmp.ne.s32.totalorder %s130, %s133
    %p139 = scmp.eq.s32.totalorder %s16, 0
    %p140 = por %p138, %p139
    %p141 = scmp.ne.s32.totalorder %s130, %s133
    %p142 = scmp.eq.s32.totalorder %s21, 1
    %p143 = por %p141, %p142
    %p144 = scmp.ne.s32.totalorder %s133, %s134
    %p145 = scmp.eq.s32.totalorder %s21, 0
    %p146 = por %p144, %p145
    %p147 = scmp.ne.s32.totalorder %s133, %s134
    %p148 = scmp.eq.s32.totalorder %s22, 1
    %p149 = por %p147, %p148
    %p151 = scmp.ne.s32.totalorder %s134, %s150
    %p152 = scmp.eq.s32.totalorder %s22, 0
    %p153 = por %p151, %p152
    %s154 = ssub.s32 %s16, %s23
    %p155 = scmp.eq.s32.totalorder %s154, 0
    %s157 = sadd.s32 %s156, 1
    %s158 = scalar_select %p155, %s156, %s157
    %p161 = pneg %p155
    %p162 = scmp.eq.s32.totalorder %s16, 1
    %p163 = por %p161, %p162
    %p164 = scmp.ne.s32.totalorder %s156, %s159
    %p165 = scmp.eq.s32.totalorder %s16, 0
    %p166 = por %p164, %p165
    %p167 = scmp.ne.s32.totalorder %s156, %s159
    %p168 = scmp.eq.s32.totalorder %s21, 1
    %p169 = por %p167, %p168
    %p170 = scmp.ne.s32.totalorder %s159, %s160
    %p171 = scmp.eq.s32.totalorder %s21, 0
    %p172 = por %p170, %p171
    %p173 = scmp.ne.s32.totalorder %s159, %s160
    %p174 = scmp.eq.s32.totalorder %s22, 1
    %p175 = por %p173, %p174
    %p177 = scmp.ne.s32.totalorder %s160, %s176
    %p178 = scmp.eq.s32.totalorder %s22, 0
    %p179 = por %p177, %p178
    %s180 = ssub.s32 %s16, %s23
    %p181 = scmp.eq.s32.totalorder %s180, 0
    %s183 = sadd.s32 %s182, 1
    %s184 = scalar_select %p181, %s182, %s183
    %p187 = pneg %p181
    %p188 = scmp.eq.s32.totalorder %s16, 1
    %p189 = por %p187, %p188
    %p190 = scmp.ne.s32.totalorder %s182, %s185
    %p191 = scmp.eq.s32.totalorder %s16, 0
    %p192 = por %p190, %p191
    %p193 = scmp.ne.s32.totalorder %s182, %s185
    %p194 = scmp.eq.s32.totalorder %s21, 1
    %p195 = por %p193, %p194
    %p196 = scmp.ne.s32.totalorder %s185, %s186
    %p197 = scmp.eq.s32.totalorder %s21, 0
    %p198 = por %p196, %p197
    %p199 = scmp.ne.s32.totalorder %s185, %s186
    %p200 = scmp.eq.s32.totalorder %s22, 1
    %p201 = por %p199, %p200
    %p203 = scmp.ne.s32.totalorder %s186, %s202
    %p204 = scmp.eq.s32.totalorder %s22, 0
    %p205 = por %p203, %p204
    %s206 = ssub.s32 %s16, %s23
    %p207 = scmp.eq.s32.totalorder %s206, 0
    %s209 = sadd.s32 %s208, 1
    %s210 = scalar_select %p207, %s208, %s209
    %p213 = pneg %p207
    %p214 = scmp.eq.s32.totalorder %s16, 1
    %p215 = por %p213, %p214
    %p216 = scmp.ne.s32.totalorder %s208, %s211
    %p217 = scmp.eq.s32.totalorder %s16, 0
    %p218 = por %p216, %p217
    %p219 = scmp.ne.s32.totalorder %s208, %s211
    %p220 = scmp.eq.s32.totalorder %s21, 1
    %p221 = por %p219, %p220
    %p222 = scmp.ne.s32.totalorder %s211, %s212
    %p223 = scmp.eq.s32.totalorder %s21, 0
    %p224 = por %p222, %p223
    %p225 = scmp.ne.s32.totalorder %s211, %s212
    %p226 = scmp.eq.s32.totalorder %s22, 1
    %p227 = por %p225, %p226
    %p229 = scmp.ne.s32.totalorder %s212, %s228
    %p230 = scmp.eq.s32.totalorder %s22, 0
    %p231 = por %p229, %p230
    %s232 = ssub.s32 %s16, %s23
    %p233 = scmp.eq.s32.totalorder %s232, 0
    %s235 = sadd.s32 %s234, 1
    %s236 = scalar_select %p233, %s234, %s235
    %p239 = pneg %p233
    %p240 = scmp.eq.s32.totalorder %s16, 1
    %p241 = por %p239, %p240
    %p242 = scmp.ne.s32.totalorder %s234, %s237
    %p243 = scmp.eq.s32.totalorder %s16, 0
    %p244 = por %p242, %p243
    %p245 = scmp.ne.s32.totalorder %s234, %s237
    %p246 = scmp.eq.s32.totalorder %s21, 1
    %p247 = por %p245, %p246
    %p248 = scmp.ne.s32.totalorder %s237, %s238
    %p249 = scmp.eq.s32.totalorder %s21, 0
    %p250 = por %p248, %p249
    %p251 = scmp.ne.s32.totalorder %s237, %s238
    %p252 = scmp.eq.s32.totalorder %s22, 1
    %p253 = por %p251, %p252
    %p255 = scmp.ne.s32.totalorder %s238, %s254
    %p256 = scmp.eq.s32.totalorder %s22, 0
    %p257 = por %p255, %p256
    %s258 = ssub.s32 %s16, %s23
    %p259 = scmp.eq.s32.totalorder %s258, 0
    %s261 = sadd.s32 %s260, 1
    %s262 = scalar_select %p259, %s260, %s261
    %p265 = pneg %p259
    %p266 = scmp.eq.s32.totalorder %s16, 1
    %p267 = por %p265, %p266
    %p268 = scmp.ne.s32.totalorder %s260, %s263
    %p269 = scmp.eq.s32.totalorder %s16, 0
    %p270 = por %p268, %p269
    %p271 = scmp.ne.s32.totalorder %s260, %s263
    %p272 = scmp.eq.s32.totalorder %s21, 1
    %p273 = por %p271, %p272
    %p274 = scmp.ne.s32.totalorder %s263, %s264
    %p275 = scmp.eq.s32.totalorder %s21, 0
    %p276 = por %p274, %p275
    %p277 = scmp.ne.s32.totalorder %s263, %s264
    %p278 = scmp.eq.s32.totalorder %s22, 1
    %p279 = por %p277, %p278
    %p281 = scmp.ne.s32.totalorder %s264, %s280
    %p282 = scmp.eq.s32.totalorder %s22, 0
    %p283 = por %p281, %p282
    %p284 = scmp.le.s32.totalorder 1, %s16
    %p285 = scmp.lt.s32.totalorder %s16, 3
    %p286 = pnand %p284, %p285
    %p287 = pneg %p286
    // Predicated region
    $region9: #{if_neuron_step.1} parent=5 // pred_check
      _
    $region10: #{if_neuron_step.1} parent=5 // pred_check_branch
      %289 = sbr.rel (%p286) target = $region12
    $region11: #{if_neuron_step.1} parent=5 // pred_region
      %s290 = ssub.s32 %s16, 1
    $region12: #{if_neuron_step.1} parent=5 // pred_fallthru
      _
    %p291 = scmp.lt.s32.totalorder %s16, 2
    // Predicated region
    $region13: #{if_neuron_step.1} parent=5 // pred_check
      %p292 = pneg %p291
    $region14: #{if_neuron_step.1} parent=5 // pred_check_branch
      %294 = sbr.rel (%p292) target = $region16
    $region15: #{if_neuron_step.1} parent=5 // pred_region
      // Predicated region
      $region17: #{if_neuron_step.1} parent=15 // pred_check
        %p295 = pneg %p36
      $region18: #{if_neuron_step.1} parent=15 // pred_check_branch
        %297 = sbr.rel (%p295) target = $region20
      $region19: #{if_neuron_step.1} parent=15 // pred_region
        %p298 = scmp.lt.s32.totalorder %s16, 1
        %s299 = scalar_select %p298, %s16, 1
        %s300 = smul.addr %s299, 8
        %s301 = scalar_lea.vmem %s0, %s300
      $region20: #{if_neuron_step.1} parent=15 // pred_fallthru
        _
      // Predicated region
      $region21: #{if_neuron_step.1} parent=15 // pred_check
        %p302 = pneg %p62
      $region22: #{if_neuron_step.1} parent=15 // pred_check_branch
        %304 = sbr.rel (%p302) target = $region24
      $region23: #{if_neuron_step.1} parent=15 // pred_region
        %p305 = scmp.lt.s32.totalorder %s16, 1
        %s306 = scalar_select %p305, %s16, 1
        %s307 = smul.addr %s306, 8
        %s308 = scalar_lea.vmem %s1, %s307
      $region24: #{if_neuron_step.1} parent=15 // pred_fallthru
        _
      // Predicated region
      $region25: #{if_neuron_step.1} parent=15 // pred_check
        %p309 = pneg %p88
      $region26: #{if_neuron_step.1} parent=15 // pred_check_branch
        %311 = sbr.rel (%p309) target = $region28
      $region27: #{if_neuron_step.1} parent=15 // pred_region
        %p312 = scmp.lt.s32.totalorder %s16, 1
        %s313 = scalar_select %p312, %s16, 1
        %s314 = smul.addr %s313, 8
        %s315 = scalar_lea.vmem %s2, %s314
      $region28: #{if_neuron_step.1} parent=15 // pred_fallthru
        _
      // Predicated region
      $region29: #{if_neuron_step.1} parent=15 // pred_check
        %p316 = pneg %p114
      $region30: #{if_neuron_step.1} parent=15 // pred_check_branch
        %318 = sbr.rel (%p316) target = $region32
      $region31: #{if_neuron_step.1} parent=15 // pred_region
        %p319 = scmp.lt.s32.totalorder %s16, 1
        %s320 = scalar_select %p319, %s16, 1
        %s321 = smul.addr %s320, 8
        %s322 = scalar_lea.vmem %s3, %s321
      $region32: #{if_neuron_step.1} parent=15 // pred_fallthru
        _
      // Predicated region
      $region33: #{if_neuron_step.1} parent=15 // pred_check
        %p323 = pneg %p140
      $region34: #{if_neuron_step.1} parent=15 // pred_check_branch
        %325 = sbr.rel (%p323) target = $region36
      $region35: #{if_neuron_step.1} parent=15 // pred_region
        %p326 = scmp.lt.s32.totalorder %s16, 1
        %s327 = scalar_select %p326, %s16, 1
        %s328 = smul.addr %s327, 8
        %s329 = scalar_lea.vmem %s4, %s328
      $region36: #{if_neuron_step.1} parent=15 // pred_fallthru
        _
    $region16: #{if_neuron_step.1} parent=5 // pred_fallthru
      _
    %p330 = scmp.le.s32.totalorder 1, %s16
    %p331 = scmp.lt.s32.totalorder %s16, 3
    %p332 = pnand %p330, %p331
    %p333 = pneg %p332
    // Predicated region
    $region37: #{if_neuron_step.1} parent=5 // pred_check
      _
    $region38: #{if_neuron_step.1} parent=5 // pred_check_branch
      %335 = sbr.rel (%p332) target = $region40
    $region39: #{if_neuron_step.1} parent=5 // pred_region
      %s336 = ssub.s32 %s16, 1
      %p337 = scmp.lt.s32.totalorder %s21, 1
      %s338 = scalar_select %p337, %s21, 1
      %s339 = smul.addr %s338, 8
      %s340 = scalar_lea.vmem %s0, %s339
      %p341 = pneg %p42
      %p342 = pneg %p39
      %p343 = scmp.lt.s32.totalorder %s21, 1
      %s344 = scalar_select %p343, %s21, 1
      %s345 = smul.addr %s344, 8
      %s346 = scalar_lea.vmem %s1, %s345
      %p347 = pneg %p68
      %p348 = pneg %p65
      %p349 = scmp.lt.s32.totalorder %s21, 1
      %s350 = scalar_select %p349, %s21, 1
      %s351 = smul.addr %s350, 8
      %s352 = scalar_lea.vmem %s2, %s351
      %p353 = pneg %p94
      %p354 = pneg %p91
      %p355 = scmp.lt.s32.totalorder %s21, 1
      %s356 = scalar_select %p355, %s21, 1
      %s357 = smul.addr %s356, 8
      %s358 = scalar_lea.vmem %s3, %s357
      %p359 = pneg %p120
      %p360 = pneg %p117
      %p361 = scmp.lt.s32.totalorder %s21, 1
      %s362 = scalar_select %p361, %s21, 1
      %s363 = smul.addr %s362, 8
      %s364 = scalar_lea.vmem %s4, %s363
      %p365 = pneg %p146
      %p366 = pneg %p143
      %p367 = pneg %p172
      %p368 = pneg %p169
      %p369 = scmp.lt.s32.totalorder %s21, 1
      %s370 = scalar_select %p369, %s21, 1
      %s371 = smul.addr %s370, 8
      %s372 = scalar_lea.vmem %s5, %s371
      %p373 = pneg %p198
      %p374 = pneg %p195
      %p375 = scmp.lt.s32.totalorder %s21, 1
      %s376 = scalar_select %p375, %s21, 1
      %s377 = smul.addr %s376, 8
      %s378 = scalar_lea.vmem %s6, %s377
      %p379 = pneg %p224
      %p380 = pneg %p221
      %p381 = scmp.lt.s32.totalorder %s21, 1
      %s382 = scalar_select %p381, %s21, 1
      %s383 = smul.addr %s382, 8
      %s384 = scalar_lea.vmem %s7, %s383
      %p385 = pneg %p250
      %p386 = pneg %p247
      %p387 = scmp.lt.s32.totalorder %s21, 1
      %s388 = scalar_select %p387, %s21, 1
      %s389 = smul.addr %s388, 8
      %s390 = scalar_lea.vmem %s8, %s389
      %p391 = pneg %p276
      %p392 = pneg %p273
      %p393 = scmp.lt.s32.totalorder %s21, 1
      %s394 = scalar_select %p393, %s21, 1
      %s395 = smul.addr %s394, 8
      %s396 = scalar_lea.vmem %s9, %s395
      %p397 = scmp.lt.s32.totalorder %s21, 1
      %s398 = scalar_select %p397, %s21, 1
      %s399 = smul.addr %s398, 8
      %s400 = scalar_lea.vmem %s0, %s399
      %p401 = scmp.lt.s32.totalorder %s21, 1
      %s402 = scalar_select %p401, %s21, 1
      %s403 = smul.addr %s402, 8
      %s404 = scalar_lea.vmem %s1, %s403
      %p405 = scmp.lt.s32.totalorder %s21, 1
      %s406 = scalar_select %p405, %s21, 1
      %s407 = smul.addr %s406, 8
      %s408 = scalar_lea.vmem %s2, %s407
      %p409 = scmp.lt.s32.totalorder %s21, 1
      %s410 = scalar_select %p409, %s21, 1
      %s411 = smul.addr %s410, 8
      %s412 = scalar_lea.vmem %s3, %s411
      %p413 = scmp.lt.s32.totalorder %s21, 1
      %s414 = scalar_select %p413, %s21, 1
      %s415 = smul.addr %s414, 8
      %s416 = scalar_lea.vmem %s4, %s415
      %p417 = scmp.lt.s32.totalorder %s21, 1
      %s418 = scalar_select %p417, %s21, 1
      %s419 = smul.addr %s418, 8
      %s420 = scalar_lea.vmem %s5, %s419
      %p421 = scmp.lt.s32.totalorder %s21, 1
      %s422 = scalar_select %p421, %s21, 1
      %s423 = smul.addr %s422, 8
      %s424 = scalar_lea.vmem %s6, %s423
      %p425 = scmp.lt.s32.totalorder %s21, 1
      %s426 = scalar_select %p425, %s21, 1
      %s427 = smul.addr %s426, 8
      %s428 = scalar_lea.vmem %s7, %s427
      %p429 = scmp.lt.s32.totalorder %s21, 1
      %s430 = scalar_select %p429, %s21, 1
      %s431 = smul.addr %s430, 8
      %s432 = scalar_lea.vmem %s8, %s431
      %p433 = scmp.lt.s32.totalorder %s21, 1
      %s434 = scalar_select %p433, %s21, 1
      %s435 = smul.addr %s434, 8
      %s436 = scalar_lea.vmem %s9, %s435
      %v437 = vld [vmem:[%s400] sm:$0xff]
      %v438 = vld [vmem:[%s404] sm:$0xff]
      %v439 = vadd.f32 %v438, %v437
      %vm440 = vcmp.ge.f32.partialorder %v439, 1.0
      %v441 = vsel %vm440, 1, 0
      %v442 = vcvt.s32.f32 %v441
      %v443 = vld [vmem:[%s408] sm:$0xff]
      %v444 = vadd.f32 %v443, %v437
      %445 = vst [vmem:[%s428] sm:$0xff] %v444
      %v446 = vld [vmem:[%s412] sm:$0xff]
      %v447 = vadd.f32 %v446, %v442
      %448 = vst [vmem:[%s432] sm:$0xff] %v447
      %v449 = vld [vmem:[%s416] sm:$0xff]
      %v450 = vadd.f32 %v449, %v442
      %451 = vst [vmem:[%s436] sm:$0xff] %v450
      %452 = vst [vmem:[%s420] sm:$0xff] %v442
      %v453 = vsub.f32 %v439, %v442
      %454 = vst [vmem:[%s424] sm:$0xff] %v453
      %p455 = scmp.lt.s32.totalorder %s21, 1
      %s456 = scalar_select %p455, %s21, 1
      %s457 = smul.addr %s456, 8
      %s458 = scalar_lea.vmem %s5, %s457
      %p459 = scmp.lt.s32.totalorder %s21, 1
      %s460 = scalar_select %p459, %s21, 1
      %s461 = smul.addr %s460, 8
      %s462 = scalar_lea.vmem %s6, %s461
      %p463 = scmp.lt.s32.totalorder %s21, 1
      %s464 = scalar_select %p463, %s21, 1
      %s465 = smul.addr %s464, 8
      %s466 = scalar_lea.vmem %s7, %s465
      %p467 = scmp.lt.s32.totalorder %s21, 1
      %s468 = scalar_select %p467, %s21, 1
      %s469 = smul.addr %s468, 8
      %s470 = scalar_lea.vmem %s8, %s469
      %p471 = scmp.lt.s32.totalorder %s21, 1
      %s472 = scalar_select %p471, %s21, 1
      %s473 = smul.addr %s472, 8
      %s474 = scalar_lea.vmem %s9, %s473
      // Predicated region
      $region41: #{if_neuron_step.1} parent=39 // pred_check
        %p475 = pneg %p169
      $region42: #{if_neuron_step.1} parent=39 // pred_check_branch
        %477 = sbr.rel (%p475) target = $region44
      $region43: #{if_neuron_step.1} parent=39 // pred_region
        _
      $region44: #{if_neuron_step.1} parent=39 // pred_fallthru
        _
      // Predicated region
      $region45: #{if_neuron_step.1} parent=39 // pred_check
        %p478 = pneg %p195
      $region46: #{if_neuron_step.1} parent=39 // pred_check_branch
        %480 = sbr.rel (%p478) target = $region48
      $region47: #{if_neuron_step.1} parent=39 // pred_region
        _
      $region48: #{if_neuron_step.1} parent=39 // pred_fallthru
        _
      // Predicated region
      $region49: #{if_neuron_step.1} parent=39 // pred_check
        %p481 = pneg %p221
      $region50: #{if_neuron_step.1} parent=39 // pred_check_branch
        %483 = sbr.rel (%p481) target = $region52
      $region51: #{if_neuron_step.1} parent=39 // pred_region
        _
      $region52: #{if_neuron_step.1} parent=39 // pred_fallthru
        _
      // Predicated region
      $region53: #{if_neuron_step.1} parent=39 // pred_check
        %p484 = pneg %p247
      $region54: #{if_neuron_step.1} parent=39 // pred_check_branch
        %486 = sbr.rel (%p484) target = $region56
      $region55: #{if_neuron_step.1} parent=39 // pred_region
        _
      $region56: #{if_neuron_step.1} parent=39 // pred_fallthru
        _
      // Predicated region
      $region57: #{if_neuron_step.1} parent=39 // pred_check
        %p487 = pneg %p273
      $region58: #{if_neuron_step.1} parent=39 // pred_check_branch
        %489 = sbr.rel (%p487) target = $region60
      $region59: #{if_neuron_step.1} parent=39 // pred_region
        _
      $region60: #{if_neuron_step.1} parent=39 // pred_fallthru
        _
    $region40: #{if_neuron_step.1} parent=5 // pred_fallthru
      _
    %p490 = scmp.le.s32.totalorder 2, %s16
    // Predicated region
    $region61: #{if_neuron_step.1} parent=5 // pred_check
      %p491 = pneg %p490
    $region62: #{if_neuron_step.1} parent=5 // pred_check_branch
      %493 = sbr.rel (%p491) target = $region64
    $region63: #{if_neuron_step.1} parent=5 // pred_region
      %s494 = ssub.s32 %s16, 2
      // Predicated region
      $region65: #{if_neuron_step.1} parent=63 // pred_check
        %p495 = pneg %p175
      $region66: #{if_neuron_step.1} parent=63 // pred_check_branch
        %497 = sbr.rel (%p495) target = $region68
      $region67: #{if_neuron_step.1} parent=63 // pred_region
        %p498 = scmp.lt.s32.totalorder %s22, 1
        %s499 = scalar_select %p498, %s22, 1
        %s500 = smul.addr %s499, 8
        %s501 = scalar_lea.vmem %s5, %s500
      $region68: #{if_neuron_step.1} parent=63 // pred_fallthru
        _
      // Predicated region
      $region69: #{if_neuron_step.1} parent=63 // pred_check
        %p502 = pneg %p201
      $region70: #{if_neuron_step.1} parent=63 // pred_check_branch
        %504 = sbr.rel (%p502) target = $region72
      $region71: #{if_neuron_step.1} parent=63 // pred_region
        %p505 = scmp.lt.s32.totalorder %s22, 1
        %s506 = scalar_select %p505, %s22, 1
        %s507 = smul.addr %s506, 8
        %s508 = scalar_lea.vmem %s6, %s507
      $region72: #{if_neuron_step.1} parent=63 // pred_fallthru
        _
      // Predicated region
      $region73: #{if_neuron_step.1} parent=63 // pred_check
        %p509 = pneg %p227
      $region74: #{if_neuron_step.1} parent=63 // pred_check_branch
        %511 = sbr.rel (%p509) target = $region76
      $region75: #{if_neuron_step.1} parent=63 // pred_region
        %p512 = scmp.lt.s32.totalorder %s22, 1
        %s513 = scalar_select %p512, %s22, 1
        %s514 = smul.addr %s513, 8
        %s515 = scalar_lea.vmem %s7, %s514
      $region76: #{if_neuron_step.1} parent=63 // pred_fallthru
        _
      // Predicated region
      $region77: #{if_neuron_step.1} parent=63 // pred_check
        %p516 = pneg %p253
      $region78: #{if_neuron_step.1} parent=63 // pred_check_branch
        %518 = sbr.rel (%p516) target = $region80
      $region79: #{if_neuron_step.1} parent=63 // pred_region
        %p519 = scmp.lt.s32.totalorder %s22, 1
        %s520 = scalar_select %p519, %s22, 1
        %s521 = smul.addr %s520, 8
        %s522 = scalar_lea.vmem %s8, %s521
      $region80: #{if_neuron_step.1} parent=63 // pred_fallthru
        _
      // Predicated region
      $region81: #{if_neuron_step.1} parent=63 // pred_check
        %p523 = pneg %p279
      $region82: #{if_neuron_step.1} parent=63 // pred_check_branch
        %525 = sbr.rel (%p523) target = $region84
      $region83: #{if_neuron_step.1} parent=63 // pred_region
        %p526 = scmp.lt.s32.totalorder %s22, 1
        %s527 = scalar_select %p526, %s22, 1
        %s528 = smul.addr %s527, 8
        %s529 = scalar_lea.vmem %s9, %s528
      $region84: #{if_neuron_step.1} parent=63 // pred_fallthru
        _
    $region64: #{if_neuron_step.1} parent=5 // pred_fallthru
      _
  $region6: #{if_neuron_step.1} parent=0 // loop_footer
    %s20 = sadd.s32 1, %s16
  $region7: #{if_neuron_step.1} parent=0 // loop_footer_branch
    %15 = sbr.rel target = $region3
  $region8: #{if_neuron_step.1} parent=0 // loop_exit
    _

</llo_original>
